<compile_context>
chip_gen: v7x
topology: tpu7x:2x2x1
jax: 0.10.0
libtpu: 0.0.40
codegen_flags: <defaults>
</compile_context>

<pallas_src>
import functools
import math

import jax
import jax.numpy as jnp
from jax.experimental import pallas as pl
from jax.experimental.pallas import tpu as pltpu


def _round_up(x, m):
    return ((x + m - 1) // m) * m


def _lstm_recurrence_kernel(g_ref, whh_ref, out_ref, cn_ref, h_sc, c_sc, *,
                            hidden_size, t_chunk, last_chunk, last_inner):
    """One grid step == t_chunk LSTM timesteps for one batch block.

    Grid is (batch_blocks, time_chunks); the time axis (last) is sequential.

    g_ref   : (t_chunk, tb, 4H) f32   pre-gates x@W_ih^T + b, gate order [i,f,o,g]
    whh_ref : (H, 4H)           bf16  recurrent weight (resident in VMEM)
    out_ref : (tb, t_chunk*H)   f32   hidden states, lane-dense slab
    cn_ref  : (tb, H)           f32   final cell state (written at last real step)
    h_sc/c_sc: (tb, H)          f32   carried state
    """
    t = pl.program_id(1)
    H = hidden_size

    @pl.when(t == 0)
    def _():
        h_sc[...] = jnp.zeros_like(h_sc)
        c_sc[...] = jnp.zeros_like(c_sc)

    whh = whh_ref[...]                  # (H, 4H) bf16 — hoisted out of the loop
    h = h_sc[...]                       # (tb, H) f32
    c = c_sc[...]                       # (tb, H) f32

    # Statically unrolled inner loop over the chunk: only the recurrent matmul
    # and the gate nonlinearities sit on the serial dependency chain.
    for k in range(t_chunk):
        gates = g_ref[k] + jnp.dot(h.astype(jnp.bfloat16), whh,
                                   preferred_element_type=jnp.float32)
        # Gate order [i, f, o, g]: one sigmoid over the (tb, 3H) slab, one tanh.
        ifo = jax.nn.sigmoid(gates[:, :3 * H])
        g_g = jnp.tanh(gates[:, 3 * H:])
        i_g = ifo[:, 0 * H:1 * H]
        f_g = ifo[:, 1 * H:2 * H]
        o_g = ifo[:, 2 * H:3 * H]
        c = f_g * c + i_g * g_g
        h = o_g * jnp.tanh(c)
        out_ref[:, k * H:(k + 1) * H] = h        # store is off the critical path

        if k == last_inner:                      # static (Python) condition
            @pl.when(t == last_chunk)            # dynamic (grid-step) condition
            def _(c_last=c):
                cn_ref[...] = c_last

    # TODO(synk): padded tail timesteps (seq_len .. t_pad) still run the full
    # serial chain; their results are discarded by the wrapper slice.
    h_sc[...] = h
    c_sc[...] = c


def lstm_pallas(gates_pre, w_hh_bf16, seq_len, hidden_size, t_chunk, tb,
                vmem_limit_bytes):
    """gates_pre: (T_pad, B_pad, 4H) f32 pre-gates (gate order [i,f,o,g]),
    w_hh_bf16: (H, 4H) bf16 (same gate order).

    Returns (out_flat (B_pad, T_pad*H) f32, c_n (B_pad, H) f32).
    """
    t_pad, b_pad, four_h = gates_pre.shape
    H = hidden_size
    n_chunks = t_pad // t_chunk
    n_b = b_pad // tb
    last_chunk = (seq_len - 1) // t_chunk
    last_inner = (seq_len - 1) % t_chunk

    kernel = functools.partial(
        _lstm_recurrence_kernel,
        hidden_size=H, t_chunk=t_chunk,
        last_chunk=last_chunk, last_inner=last_inner)

    grid_spec = pltpu.PrefetchScalarGridSpec(
        num_scalar_prefetch=0,
        grid=(n_b, n_chunks),
        in_specs=[
            pl.BlockSpec((t_chunk, tb, four_h), lambda b, t: (t, b, 0)),  # pre-gates
            pl.BlockSpec((H, four_h), lambda b, t: (0, 0)),               # W_hh resident
        ],
        out_specs=[
            pl.BlockSpec((tb, t_chunk * H), lambda b, t: (b, t)),         # lane-dense slab
            pl.BlockSpec((tb, H), lambda b, t: (b, 0)),                   # c_n
        ],
        scratch_shapes=[
            pltpu.VMEM((tb, H), jnp.float32),                             # h carry
            pltpu.VMEM((tb, H), jnp.float32),                             # c carry
        ],
    )

    out_shapes = (
        jax.ShapeDtypeStruct((b_pad, t_pad * H), jnp.float32),
        jax.ShapeDtypeStruct((b_pad, H), jnp.float32),
    )

    return pl.pallas_call(
        kernel,
        out_shape=out_shapes,
        grid_spec=grid_spec,
        compiler_params=pltpu.CompilerParams(
            # batch axis independent -> "parallel" (megacore on v7x);
            # time recurrence is strictly sequential -> "arbitrary".
            dimension_semantics=("parallel", "arbitrary"),
            vmem_limit_bytes=vmem_limit_bytes,
        ),
    )(gates_pre, w_hh_bf16)


class EncoderPallas:
    """JAX/Pallas port of the PyTorch Encoder (Embedding + 1-layer LSTM)."""

    def __init__(self, input_size, hidden_size, vocab_size, key):
        self.input_size = input_size
        self.hidden_size = hidden_size
        self.vocab_size = vocab_size
        H = hidden_size

        k_emb, k_ih, k_hh, k_bih, k_bhh = jax.random.split(key, 5)

        # Embedding: uniform(-0.25, 0.25); padding_idx=0 row is zero.
        # TODO(synk): the original init_weights copies pretrained vectors from
        # a global id_to_vec dict; not reproducible here, uniform init kept.
        emb = jax.random.uniform(k_emb, (vocab_size, input_size),
                                 minval=-0.25, maxval=0.25, dtype=jnp.float32)
        self.embedding = emb.at[0].set(0.0)

        # LSTM weights (PyTorch layout: weight_ih_l0 (4H, I), weight_hh_l0 (4H, H)).
        w_ih = jax.nn.initializers.orthogonal()(k_ih, (4 * H, input_size),
                                                jnp.float32)
        w_hh = jax.random.uniform(k_hh, (4 * H, H),
                                  minval=-0.01, maxval=0.01, dtype=jnp.float32)
        bound = 1.0 / (H ** 0.5)
        b_ih = jax.random.uniform(k_bih, (4 * H,),
                                  minval=-bound, maxval=bound, dtype=jnp.float32)
        b_hh = jax.random.uniform(k_bhh, (4 * H,),
                                  minval=-bound, maxval=bound, dtype=jnp.float32)

        # PyTorch-ordered copies (kept for the pure-JAX reference check).
        self.w_ih_t = jnp.transpose(w_ih)                 # (I, 4H), [i, f, g, o]
        self.w_hh_t = jnp.transpose(w_hh)                 # (H, 4H), [i, f, g, o]
        self.bias = b_ih + b_hh                           # (4H,)

        # Kernel-side parameters: permute gate columns [i, f, g, o] -> [i, f, o, g]
        # so the kernel applies one sigmoid to a contiguous 3H slab.
        perm = jnp.concatenate([jnp.arange(0, 2 * H),
                                jnp.arange(3 * H, 4 * H),
                                jnp.arange(2 * H, 3 * H)])
        w_ih_t_p = self.w_ih_t[:, perm]
        self.w_hh_bf16 = self.w_hh_t[:, perm].astype(jnp.bfloat16)   # (H, 4H) bf16
        # Fold the embedding through the input projection ONCE at init: per
        # call the pre-gates are a pure row gather of this (V, 4H) table.
        self.emb_proj = self.embedding @ w_ih_t_p + self.bias[perm]  # (V, 4H) f32

    @functools.partial(jax.jit, static_argnums=0)
    def __call__(self, inputs):
        # inputs: (B, T) int32 token ids (batch_first, like the PyTorch module)
        B, T = inputs.shape
        H = self.hidden_size

        # ---- Tiling ---------------------------------------------------------
        # Pad batch to a multiple of 8 sublanes; split into 2 "parallel" blocks
        # (megacore on v7x) when large enough.
        b_pad = max(8, _round_up(B, 8))
        tb = b_pad // 2 if (b_pad >= 16 and b_pad % 16 == 0) else b_pad

        # t_chunk: multiple of 8 sublanes AND keeps t_chunk*H a multiple of
        # 128 lanes so the per-chunk output slab is lane-dense.
        lane_mult = 128 // math.gcd(H, 128)
        step_mult = (8 * lane_mult) // math.gcd(8, lane_mult)      # lcm(8, lane_mult)
        t_chunk = min(max(64, step_mult), _round_up(T, step_mult))

        def step_bytes(tc):
            return (2 * tc * tb * 4 * H * 4       # pre-gate block, double buffered
                    + 2 * tb * tc * H * 4         # output slab, double buffered
                    + 2 * H * 4 * H * 2           # W_hh bf16
                    + 2 * tb * H * 4)             # h/c scratch

        budget = 24 * 1024 * 1024                 # fits v7x's 64 MiB VMEM with room
        while t_chunk > step_mult and step_bytes(t_chunk) > budget:
            t_chunk -= step_mult
        t_pad = _round_up(T, t_chunk)
        vmem_limit = int(min(40 * 1024 * 1024,
                             max(16 * 1024 * 1024, 2 * step_bytes(t_chunk))))

        # ---- Pre-gates: pad the tiny id array, then a single row gather -----
        ids = jnp.zeros((b_pad, t_pad), dtype=inputs.dtype).at[:B, :T].set(inputs)
        gates_pre = jnp.take(self.emb_proj, ids.T, axis=0)          # (t_pad, b_pad, 4H)

        out_flat, c_n_pad = lstm_pallas(gates_pre, self.w_hh_bf16, T, H,
                                        t_chunk, tb, vmem_limit)

        outputs = out_flat.reshape(b_pad, t_pad, H)[:B, :T, :]      # (B, T, H)
        h_n = outputs[:, -1, :]                                     # final hidden
        c_n = c_n_pad[:B]
        hiddens = (h_n[None, :, :], c_n[None, :, :])                # (1, B, H) each
        return outputs, hiddens


def _lstm_reference(emb_tbi, w_ih_t, w_hh_t, bias):
    """Pure-JAX reference (PyTorch gate order). The recurrent matmul is done in
    bf16 with f32 accumulation to mirror the kernel's MXU path; everything else
    is f32. Returns ((B,T,H), h_n, c_n)."""
    T, B, _ = emb_tbi.shape
    H = w_hh_t.shape[0]
    whh_bf16 = w_hh_t.astype(jnp.bfloat16)
    h = jnp.zeros((B, H), jnp.float32)
    c = jnp.zeros((B, H), jnp.float32)
    outs = []
    for t in range(T):
        g = (emb_tbi[t] @ w_ih_t + bias
             + jnp.dot(h.astype(jnp.bfloat16), whh_bf16,
                       preferred_element_type=jnp.float32))
        i = jax.nn.sigmoid(g[:, 0 * H:1 * H])
        f = jax.nn.sigmoid(g[:, 1 * H:2 * H])
        gg = jnp.tanh(g[:, 2 * H:3 * H])
        o = jax.nn.sigmoid(g[:, 3 * H:4 * H])
        c = f * c + i * gg
        h = o * jnp.tanh(c)
        outs.append(h)
    return jnp.stack(outs, axis=1), h, c


if __name__ == "__main__":
    key = jax.random.PRNGKey(0)
    k_model, k_ids = jax.random.split(key)

    B, T = 2, 8
    INPUT_SIZE, HIDDEN_SIZE, VOCAB_SIZE = 32, 32, 16

    enc = EncoderPallas(INPUT_SIZE, HIDDEN_SIZE, VOCAB_SIZE, k_model)

    inputs = jax.random.randint(k_ids, (B, T), minval=0, maxval=VOCAB_SIZE,
                                dtype=jnp.int32)

    outputs, (h_n, c_n) = enc(inputs)
    jax.block_until_ready((outputs, h_n, c_n))

    # Sanity check vs pure-JAX reference (same bf16 recurrent-matmul math).
    emb_tbi = jnp.take(enc.embedding, inputs.T, axis=0)
    ref_out, ref_h, ref_c = _lstm_reference(emb_tbi, enc.w_ih_t, enc.w_hh_t,
                                            enc.bias)
    assert outputs.shape == (B, T, HIDDEN_SIZE)
    assert h_n.shape == (1, B, HIDDEN_SIZE) and c_n.shape == (1, B, HIDDEN_SIZE)
    assert jnp.allclose(outputs, ref_out, atol=1e-4), \
        float(jnp.max(jnp.abs(outputs - ref_out)))
    assert jnp.allclose(h_n[0], ref_h, atol=1e-4)
    assert jnp.allclose(c_n[0], ref_c, atol=1e-4)

    print("KERNEL_OK")
</pallas_src>

<mosaic_0001>
module attributes {stable_mosaic.version = 11 : i64} {
  func.func @_lstm_recurrence_kernel(%arg0: i32, %arg1: i32, %arg2: memref<8x8x128xf32, #tpu.memory_space<vmem>>, %arg3: memref<32x128xbf16, #tpu.memory_space<vmem>>, %arg4: memref<8x256xf32, #tpu.memory_space<vmem>>, %arg5: memref<8x32xf32, #tpu.memory_space<vmem>>, %arg6: memref<8x32xf32, #tpu.memory_space<vmem>>, %arg7: memref<8x32xf32, #tpu.memory_space<vmem>>) attributes {dimension_semantics = [#tpu.dimension_semantics<parallel>, #tpu.dimension_semantics<arbitrary>], iteration_bounds = array<i64: 1, 1>, scalar_prefetch = 0 : i64, scratch_operands = 2 : i64, tpu.core_type = #tpu.core_type<tc>, window_params = [{transform_indices = @transform_0, window_bounds = array<i64: 8, 8, 128>}, {pipeline_mode = #tpu.pipeline_mode<synchronous>, transform_indices = @transform_1, window_bounds = array<i64: 32, 128>}, {transform_indices = @transform_2, window_bounds = array<i64: 8, 256>}, {transform_indices = @transform_3, window_bounds = array<i64: 8, 32>}]} {
    %c0_i32 = arith.constant 0 : i32
    %0 = arith.cmpi eq, %arg1, %c0_i32 : i32
    %1 = arith.extui %0 : i1 to i32
    %c0_i32_0 = arith.constant 0 : i32
    %2 = arith.cmpi ne, %1, %c0_i32_0 : i32
    scf.if %2 {
      %cst_53 = arith.constant 0.000000e+00 : f32
      %187 = vector.broadcast %cst_53 : f32 to vector<8x32xf32>
      %c0_54 = arith.constant 0 : index
      %c0_55 = arith.constant 0 : index
      %188 = vector.load %arg6[%c0_54, %c0_55] : memref<8x32xf32, #tpu.memory_space<vmem>>, vector<8x32xf32>
      tpu.vector_store %arg6[%c0_54, %c0_55], %187 {strides = array<i32>} : memref<8x32xf32, #tpu.memory_space<vmem>>, vector<8x32xf32>,
      %cst_56 = arith.constant 0.000000e+00 : f32
      %189 = vector.broadcast %cst_56 : f32 to vector<8x32xf32>
      %c0_57 = arith.constant 0 : index
      %c0_58 = arith.constant 0 : index
      %190 = vector.load %arg7[%c0_57, %c0_58] : memref<8x32xf32, #tpu.memory_space<vmem>>, vector<8x32xf32>
      tpu.vector_store %arg7[%c0_57, %c0_58], %189 {strides = array<i32>} : memref<8x32xf32, #tpu.memory_space<vmem>>, vector<8x32xf32>,
    } else {
    }
    %c0 = arith.constant 0 : index
    %c0_1 = arith.constant 0 : index
    %3 = vector.load %arg3[%c0, %c0_1] : memref<32x128xbf16, #tpu.memory_space<vmem>>, vector<32x128xbf16>
    %c0_2 = arith.constant 0 : index
    %c0_3 = arith.constant 0 : index
    %4 = vector.load %arg6[%c0_2, %c0_3] : memref<8x32xf32, #tpu.memory_space<vmem>>, vector<8x32xf32>
    %c0_4 = arith.constant 0 : index
    %c0_5 = arith.constant 0 : index
    %5 = vector.load %arg7[%c0_4, %c0_5] : memref<8x32xf32, #tpu.memory_space<vmem>>, vector<8x32xf32>
    %c0_6 = arith.constant 0 : index
    %c0_7 = arith.constant 0 : index
    %c0_8 = arith.constant 0 : index
    %6 = vector.load %arg2[%c0_6, %c0_7, %c0_8] : memref<8x8x128xf32, #tpu.memory_space<vmem>>, vector<1x8x128xf32>
    %7 = vector.shape_cast %6 : vector<1x8x128xf32> to vector<8x128xf32>
    %8 = arith.truncf %4 : vector<8x32xf32> to vector<8x32xbf16>
    %cst = arith.constant dense<0.000000e+00> : vector<8x128xf32>
    %9 = tpu.matmul %8, %3, %cst {dimension_numbers = #tpu.dot_dimension_numbers<[1], [0], [0], [1], [0, 0, 1, 1], [], []>} : vector<8x32xbf16>, vector<32x128xbf16>, vector<8x128xf32> -> vector<8x128xf32>
    %10 = arith.addf %7, %9 : vector<8x128xf32>
    %11 = vector.extract_strided_slice %10 {offsets = [0, 0], sizes = [8, 96], strides = [1, 1]} : vector<8x128xf32> to vector<8x96xf32>
    %12 = arith.negf %11 : vector<8x96xf32>
    %13 = math.exp %12 : vector<8x96xf32>
    %cst_9 = arith.constant 1.000000e+00 : f32
    %14 = vector.broadcast %cst_9 : f32 to vector<8x96xf32>
    %15 = arith.addf %14, %13 : vector<8x96xf32>
    %16 = arith.divf %14, %15 : vector<8x96xf32>
    %17 = vector.extract_strided_slice %10 {offsets = [0, 96], sizes = [8, 32], strides = [1, 1]} : vector<8x128xf32> to vector<8x32xf32>
    %18 = math.tanh %17 : vector<8x32xf32>
    %19 = vector.extract_strided_slice %16 {offsets = [0, 0], sizes = [8, 32], strides = [1, 1]} : vector<8x96xf32> to vector<8x32xf32>
    %20 = vector.extract_strided_slice %16 {offsets = [0, 32], sizes = [8, 32], strides = [1, 1]} : vector<8x96xf32> to vector<8x32xf32>
    %21 = vector.extract_strided_slice %16 {offsets = [0, 64], sizes = [8, 32], strides = [1, 1]} : vector<8x96xf32> to vector<8x32xf32>
    %22 = arith.mulf %20, %5 : vector<8x32xf32>
    %23 = arith.mulf %19, %18 : vector<8x32xf32>
    %24 = arith.addf %22, %23 : vector<8x32xf32>
    %25 = math.tanh %24 : vector<8x32xf32>
    %26 = arith.mulf %21, %25 : vector<8x32xf32>
    %c0_10 = arith.constant 0 : index
    %c0_11 = arith.constant 0 : index
    %27 = vector.load %arg4[%c0_10, %c0_11] : memref<8x256xf32, #tpu.memory_space<vmem>>, vector<8x32xf32>
    tpu.vector_store %arg4[%c0_10, %c0_11], %26 {strides = array<i32>} : memref<8x256xf32, #tpu.memory_space<vmem>>, vector<8x32xf32>,
    %c1 = arith.constant 1 : index
    %c0_12 = arith.constant 0 : index
    %c0_13 = arith.constant 0 : index
    %28 = vector.load %arg2[%c1, %c0_12, %c0_13] : memref<8x8x128xf32, #tpu.memory_space<vmem>>, vector<1x8x128xf32>
    %29 = vector.shape_cast %28 : vector<1x8x128xf32> to vector<8x128xf32>
    %30 = arith.truncf %26 : vector<8x32xf32> to vector<8x32xbf16>
    %cst_14 = arith.constant dense<0.000000e+00> : vector<8x128xf32>
    %31 = tpu.matmul %30, %3, %cst_14 {dimension_numbers = #tpu.dot_dimension_numbers<[1], [0], [0], [1], [0, 0, 1, 1], [], []>} : vector<8x32xbf16>, vector<32x128xbf16>, vector<8x128xf32> -> vector<8x128xf32>
    %32 = arith.addf %29, %31 : vector<8x128xf32>
    %33 = vector.extract_strided_slice %32 {offsets = [0, 0], sizes = [8, 96], strides = [1, 1]} : vector<8x128xf32> to vector<8x96xf32>
    %34 = arith.negf %33 : vector<8x96xf32>
    %35 = math.exp %34 : vector<8x96xf32>
    %cst_15 = arith.constant 1.000000e+00 : f32
    %36 = vector.broadcast %cst_15 : f32 to vector<8x96xf32>
    %37 = arith.addf %36, %35 : vector<8x96xf32>
    %38 = arith.divf %36, %37 : vector<8x96xf32>
    %39 = vector.extract_strided_slice %32 {offsets = [0, 96], sizes = [8, 32], strides = [1, 1]} : vector<8x128xf32> to vector<8x32xf32>
    %40 = math.tanh %39 : vector<8x32xf32>
    %41 = vector.extract_strided_slice %38 {offsets = [0, 0], sizes = [8, 32], strides = [1, 1]} : vector<8x96xf32> to vector<8x32xf32>
    %42 = vector.extract_strided_slice %38 {offsets = [0, 32], sizes = [8, 32], strides = [1, 1]} : vector<8x96xf32> to vector<8x32xf32>
    %43 = vector.extract_strided_slice %38 {offsets = [0, 64], sizes = [8, 32], strides = [1, 1]} : vector<8x96xf32> to vector<8x32xf32>
    %44 = arith.mulf %42, %24 : vector<8x32xf32>
    %45 = arith.mulf %41, %40 : vector<8x32xf32>
    %46 = arith.addf %44, %45 : vector<8x32xf32>
    %47 = math.tanh %46 : vector<8x32xf32>
    %48 = arith.mulf %43, %47 : vector<8x32xf32>
    %c0_16 = arith.constant 0 : index
    %c32 = arith.constant 32 : index
    %49 = vector.load %arg4[%c0_16, %c32] : memref<8x256xf32, #tpu.memory_space<vmem>>, vector<8x32xf32>
    tpu.vector_store %arg4[%c0_16, %c32], %48 {strides = array<i32>} : memref<8x256xf32, #tpu.memory_space<vmem>>, vector<8x32xf32>,
    %c2 = arith.constant 2 : index
    %c0_17 = arith.constant 0 : index
    %c0_18 = arith.constant 0 : index
    %50 = vector.load %arg2[%c2, %c0_17, %c0_18] : memref<8x8x128xf32, #tpu.memory_space<vmem>>, vector<1x8x128xf32>
    %51 = vector.shape_cast %50 : vector<1x8x128xf32> to vector<8x128xf32>
    %52 = arith.truncf %48 : vector<8x32xf32> to vector<8x32xbf16>
    %cst_19 = arith.constant dense<0.000000e+00> : vector<8x128xf32>
    %53 = tpu.matmul %52, %3, %cst_19 {dimension_numbers = #tpu.dot_dimension_numbers<[1], [0], [0], [1], [0, 0, 1, 1], [], []>} : vector<8x32xbf16>, vector<32x128xbf16>, vector<8x128xf32> -> vector<8x128xf32>
    %54 = arith.addf %51, %53 : vector<8x128xf32>
    %55 = vector.extract_strided_slice %54 {offsets = [0, 0], sizes = [8, 96], strides = [1, 1]} : vector<8x128xf32> to vector<8x96xf32>
    %56 = arith.negf %55 : vector<8x96xf32>
    %57 = math.exp %56 : vector<8x96xf32>
    %cst_20 = arith.constant 1.000000e+00 : f32
    %58 = vector.broadcast %cst_20 : f32 to vector<8x96xf32>
    %59 = arith.addf %58, %57 : vector<8x96xf32>
    %60 = arith.divf %58, %59 : vector<8x96xf32>
    %61 = vector.extract_strided_slice %54 {offsets = [0, 96], sizes = [8, 32], strides = [1, 1]} : vector<8x128xf32> to vector<8x32xf32>
    %62 = math.tanh %61 : vector<8x32xf32>
    %63 = vector.extract_strided_slice %60 {offsets = [0, 0], sizes = [8, 32], strides = [1, 1]} : vector<8x96xf32> to vector<8x32xf32>
    %64 = vector.extract_strided_slice %60 {offsets = [0, 32], sizes = [8, 32], strides = [1, 1]} : vector<8x96xf32> to vector<8x32xf32>
    %65 = vector.extract_strided_slice %60 {offsets = [0, 64], sizes = [8, 32], strides = [1, 1]} : vector<8x96xf32> to vector<8x32xf32>
    %66 = arith.mulf %64, %46 : vector<8x32xf32>
    %67 = arith.mulf %63, %62 : vector<8x32xf32>
    %68 = arith.addf %66, %67 : vector<8x32xf32>
    %69 = math.tanh %68 : vector<8x32xf32>
    %70 = arith.mulf %65, %69 : vector<8x32xf32>
    %c0_21 = arith.constant 0 : index
    %c64 = arith.constant 64 : index
    %71 = vector.load %arg4[%c0_21, %c64] : memref<8x256xf32, #tpu.memory_space<vmem>>, vector<8x32xf32>
    tpu.vector_store %arg4[%c0_21, %c64], %70 {strides = array<i32>} : memref<8x256xf32, #tpu.memory_space<vmem>>, vector<8x32xf32>,
    %c3 = arith.constant 3 : index
    %c0_22 = arith.constant 0 : index
    %c0_23 = arith.constant 0 : index
    %72 = vector.load %arg2[%c3, %c0_22, %c0_23] : memref<8x8x128xf32, #tpu.memory_space<vmem>>, vector<1x8x128xf32>
    %73 = vector.shape_cast %72 : vector<1x8x128xf32> to vector<8x128xf32>
    %74 = arith.truncf %70 : vector<8x32xf32> to vector<8x32xbf16>
    %cst_24 = arith.constant dense<0.000000e+00> : vector<8x128xf32>
    %75 = tpu.matmul %74, %3, %cst_24 {dimension_numbers = #tpu.dot_dimension_numbers<[1], [0], [0], [1], [0, 0, 1, 1], [], []>} : vector<8x32xbf16>, vector<32x128xbf16>, vector<8x128xf32> -> vector<8x128xf32>
    %76 = arith.addf %73, %75 : vector<8x128xf32>
    %77 = vector.extract_strided_slice %76 {offsets = [0, 0], sizes = [8, 96], strides = [1, 1]} : vector<8x128xf32> to vector<8x96xf32>
    %78 = arith.negf %77 : vector<8x96xf32>
    %79 = math.exp %78 : vector<8x96xf32>
    %cst_25 = arith.constant 1.000000e+00 : f32
    %80 = vector.broadcast %cst_25 : f32 to vector<8x96xf32>
    %81 = arith.addf %80, %79 : vector<8x96xf32>
    %82 = arith.divf %80, %81 : vector<8x96xf32>
    %83 = vector.extract_strided_slice %76 {offsets = [0, 96], sizes = [8, 32], strides = [1, 1]} : vector<8x128xf32> to vector<8x32xf32>
    %84 = math.tanh %83 : vector<8x32xf32>
    %85 = vector.extract_strided_slice %82 {offsets = [0, 0], sizes = [8, 32], strides = [1, 1]} : vector<8x96xf32> to vector<8x32xf32>
    %86 = vector.extract_strided_slice %82 {offsets = [0, 32], sizes = [8, 32], strides = [1, 1]} : vector<8x96xf32> to vector<8x32xf32>
    %87 = vector.extract_strided_slice %82 {offsets = [0, 64], sizes = [8, 32], strides = [1, 1]} : vector<8x96xf32> to vector<8x32xf32>
    %88 = arith.mulf %86, %68 : vector<8x32xf32>
    %89 = arith.mulf %85, %84 : vector<8x32xf32>
    %90 = arith.addf %88, %89 : vector<8x32xf32>
    %91 = math.tanh %90 : vector<8x32xf32>
    %92 = arith.mulf %87, %91 : vector<8x32xf32>
    %c0_26 = arith.constant 0 : index
    %c96 = arith.constant 96 : index
    %93 = vector.load %arg4[%c0_26, %c96] : memref<8x256xf32, #tpu.memory_space<vmem>>, vector<8x32xf32>
    tpu.vector_store %arg4[%c0_26, %c96], %92 {strides = array<i32>} : memref<8x256xf32, #tpu.memory_space<vmem>>, vector<8x32xf32>,
    %c4 = arith.constant 4 : index
    %c0_27 = arith.constant 0 : index
    %c0_28 = arith.constant 0 : index
    %94 = vector.load %arg2[%c4, %c0_27, %c0_28] : memref<8x8x128xf32, #tpu.memory_space<vmem>>, vector<1x8x128xf32>
    %95 = vector.shape_cast %94 : vector<1x8x128xf32> to vector<8x128xf32>
    %96 = arith.truncf %92 : vector<8x32xf32> to vector<8x32xbf16>
    %cst_29 = arith.constant dense<0.000000e+00> : vector<8x128xf32>
    %97 = tpu.matmul %96, %3, %cst_29 {dimension_numbers = #tpu.dot_dimension_numbers<[1], [0], [0], [1], [0, 0, 1, 1], [], []>} : vector<8x32xbf16>, vector<32x128xbf16>, vector<8x128xf32> -> vector<8x128xf32>
    %98 = arith.addf %95, %97 : vector<8x128xf32>
    %99 = vector.extract_strided_slice %98 {offsets = [0, 0], sizes = [8, 96], strides = [1, 1]} : vector<8x128xf32> to vector<8x96xf32>
    %100 = arith.negf %99 : vector<8x96xf32>
    %101 = math.exp %100 : vector<8x96xf32>
    %cst_30 = arith.constant 1.000000e+00 : f32
    %102 = vector.broadcast %cst_30 : f32 to vector<8x96xf32>
    %103 = arith.addf %102, %101 : vector<8x96xf32>
    %104 = arith.divf %102, %103 : vector<8x96xf32>
    %105 = vector.extract_strided_slice %98 {offsets = [0, 96], sizes = [8, 32], strides = [1, 1]} : vector<8x128xf32> to vector<8x32xf32>
    %106 = math.tanh %105 : vector<8x32xf32>
    %107 = vector.extract_strided_slice %104 {offsets = [0, 0], sizes = [8, 32], strides = [1, 1]} : vector<8x96xf32> to vector<8x32xf32>
    %108 = vector.extract_strided_slice %104 {offsets = [0, 32], sizes = [8, 32], strides = [1, 1]} : vector<8x96xf32> to vector<8x32xf32>
    %109 = vector.extract_strided_slice %104 {offsets = [0, 64], sizes = [8, 32], strides = [1, 1]} : vector<8x96xf32> to vector<8x32xf32>
    %110 = arith.mulf %108, %90 : vector<8x32xf32>
    %111 = arith.mulf %107, %106 : vector<8x32xf32>
    %112 = arith.addf %110, %111 : vector<8x32xf32>
    %113 = math.tanh %112 : vector<8x32xf32>
    %114 = arith.mulf %109, %113 : vector<8x32xf32>
    %c0_31 = arith.constant 0 : index
    %c128 = arith.constant 128 : index
    %115 = vector.load %arg4[%c0_31, %c128] : memref<8x256xf32, #tpu.memory_space<vmem>>, vector<8x32xf32>
    tpu.vector_store %arg4[%c0_31, %c128], %114 {strides = array<i32>} : memref<8x256xf32, #tpu.memory_space<vmem>>, vector<8x32xf32>,
    %c5 = arith.constant 5 : index
    %c0_32 = arith.constant 0 : index
    %c0_33 = arith.constant 0 : index
    %116 = vector.load %arg2[%c5, %c0_32, %c0_33] : memref<8x8x128xf32, #tpu.memory_space<vmem>>, vector<1x8x128xf32>
    %117 = vector.shape_cast %116 : vector<1x8x128xf32> to vector<8x128xf32>
    %118 = arith.truncf %114 : vector<8x32xf32> to vector<8x32xbf16>
    %cst_34 = arith.constant dense<0.000000e+00> : vector<8x128xf32>
    %119 = tpu.matmul %118, %3, %cst_34 {dimension_numbers = #tpu.dot_dimension_numbers<[1], [0], [0], [1], [0, 0, 1, 1], [], []>} : vector<8x32xbf16>, vector<32x128xbf16>, vector<8x128xf32> -> vector<8x128xf32>
    %120 = arith.addf %117, %119 : vector<8x128xf32>
    %121 = vector.extract_strided_slice %120 {offsets = [0, 0], sizes = [8, 96], strides = [1, 1]} : vector<8x128xf32> to vector<8x96xf32>
    %122 = arith.negf %121 : vector<8x96xf32>
    %123 = math.exp %122 : vector<8x96xf32>
    %cst_35 = arith.constant 1.000000e+00 : f32
    %124 = vector.broadcast %cst_35 : f32 to vector<8x96xf32>
    %125 = arith.addf %124, %123 : vector<8x96xf32>
    %126 = arith.divf %124, %125 : vector<8x96xf32>
    %127 = vector.extract_strided_slice %120 {offsets = [0, 96], sizes = [8, 32], strides = [1, 1]} : vector<8x128xf32> to vector<8x32xf32>
    %128 = math.tanh %127 : vector<8x32xf32>
    %129 = vector.extract_strided_slice %126 {offsets = [0, 0], sizes = [8, 32], strides = [1, 1]} : vector<8x96xf32> to vector<8x32xf32>
    %130 = vector.extract_strided_slice %126 {offsets = [0, 32], sizes = [8, 32], strides = [1, 1]} : vector<8x96xf32> to vector<8x32xf32>
    %131 = vector.extract_strided_slice %126 {offsets = [0, 64], sizes = [8, 32], strides = [1, 1]} : vector<8x96xf32> to vector<8x32xf32>
    %132 = arith.mulf %130, %112 : vector<8x32xf32>
    %133 = arith.mulf %129, %128 : vector<8x32xf32>
    %134 = arith.addf %132, %133 : vector<8x32xf32>
    %135 = math.tanh %134 : vector<8x32xf32>
    %136 = arith.mulf %131, %135 : vector<8x32xf32>
    %c0_36 = arith.constant 0 : index
    %c160 = arith.constant 160 : index
    %137 = vector.load %arg4[%c0_36, %c160] : memref<8x256xf32, #tpu.memory_space<vmem>>, vector<8x32xf32>
    tpu.vector_store %arg4[%c0_36, %c160], %136 {strides = array<i32>} : memref<8x256xf32, #tpu.memory_space<vmem>>, vector<8x32xf32>,
    %c6 = arith.constant 6 : index
    %c0_37 = arith.constant 0 : index
    %c0_38 = arith.constant 0 : index
    %138 = vector.load %arg2[%c6, %c0_37, %c0_38] : memref<8x8x128xf32, #tpu.memory_space<vmem>>, vector<1x8x128xf32>
    %139 = vector.shape_cast %138 : vector<1x8x128xf32> to vector<8x128xf32>
    %140 = arith.truncf %136 : vector<8x32xf32> to vector<8x32xbf16>
    %cst_39 = arith.constant dense<0.000000e+00> : vector<8x128xf32>
    %141 = tpu.matmul %140, %3, %cst_39 {dimension_numbers = #tpu.dot_dimension_numbers<[1], [0], [0], [1], [0, 0, 1, 1], [], []>} : vector<8x32xbf16>, vector<32x128xbf16>, vector<8x128xf32> -> vector<8x128xf32>
    %142 = arith.addf %139, %141 : vector<8x128xf32>
    %143 = vector.extract_strided_slice %142 {offsets = [0, 0], sizes = [8, 96], strides = [1, 1]} : vector<8x128xf32> to vector<8x96xf32>
    %144 = arith.negf %143 : vector<8x96xf32>
    %145 = math.exp %144 : vector<8x96xf32>
    %cst_40 = arith.constant 1.000000e+00 : f32
    %146 = vector.broadcast %cst_40 : f32 to vector<8x96xf32>
    %147 = arith.addf %146, %145 : vector<8x96xf32>
    %148 = arith.divf %146, %147 : vector<8x96xf32>
    %149 = vector.extract_strided_slice %142 {offsets = [0, 96], sizes = [8, 32], strides = [1, 1]} : vector<8x128xf32> to vector<8x32xf32>
    %150 = math.tanh %149 : vector<8x32xf32>
    %151 = vector.extract_strided_slice %148 {offsets = [0, 0], sizes = [8, 32], strides = [1, 1]} : vector<8x96xf32> to vector<8x32xf32>
    %152 = vector.extract_strided_slice %148 {offsets = [0, 32], sizes = [8, 32], strides = [1, 1]} : vector<8x96xf32> to vector<8x32xf32>
    %153 = vector.extract_strided_slice %148 {offsets = [0, 64], sizes = [8, 32], strides = [1, 1]} : vector<8x96xf32> to vector<8x32xf32>
    %154 = arith.mulf %152, %134 : vector<8x32xf32>
    %155 = arith.mulf %151, %150 : vector<8x32xf32>
    %156 = arith.addf %154, %155 : vector<8x32xf32>
    %157 = math.tanh %156 : vector<8x32xf32>
    %158 = arith.mulf %153, %157 : vector<8x32xf32>
    %c0_41 = arith.constant 0 : index
    %c192 = arith.constant 192 : index
    %159 = vector.load %arg4[%c0_41, %c192] : memref<8x256xf32, #tpu.memory_space<vmem>>, vector<8x32xf32>
    tpu.vector_store %arg4[%c0_41, %c192], %158 {strides = array<i32>} : memref<8x256xf32, #tpu.memory_space<vmem>>, vector<8x32xf32>,
    %c7 = arith.constant 7 : index
    %c0_42 = arith.constant 0 : index
    %c0_43 = arith.constant 0 : index
    %160 = vector.load %arg2[%c7, %c0_42, %c0_43] : memref<8x8x128xf32, #tpu.memory_space<vmem>>, vector<1x8x128xf32>
    %161 = vector.shape_cast %160 : vector<1x8x128xf32> to vector<8x128xf32>
    %162 = arith.truncf %158 : vector<8x32xf32> to vector<8x32xbf16>
    %cst_44 = arith.constant dense<0.000000e+00> : vector<8x128xf32>
    %163 = tpu.matmul %162, %3, %cst_44 {dimension_numbers = #tpu.dot_dimension_numbers<[1], [0], [0], [1], [0, 0, 1, 1], [], []>} : vector<8x32xbf16>, vector<32x128xbf16>, vector<8x128xf32> -> vector<8x128xf32>
    %164 = arith.addf %161, %163 : vector<8x128xf32>
    %165 = vector.extract_strided_slice %164 {offsets = [0, 0], sizes = [8, 96], strides = [1, 1]} : vector<8x128xf32> to vector<8x96xf32>
    %166 = arith.negf %165 : vector<8x96xf32>
    %167 = math.exp %166 : vector<8x96xf32>
    %cst_45 = arith.constant 1.000000e+00 : f32
    %168 = vector.broadcast %cst_45 : f32 to vector<8x96xf32>
    %169 = arith.addf %168, %167 : vector<8x96xf32>
    %170 = arith.divf %168, %169 : vector<8x96xf32>
    %171 = vector.extract_strided_slice %164 {offsets = [0, 96], sizes = [8, 32], strides = [1, 1]} : vector<8x128xf32> to vector<8x32xf32>
    %172 = math.tanh %171 : vector<8x32xf32>
    %173 = vector.extract_strided_slice %170 {offsets = [0, 0], sizes = [8, 32], strides = [1, 1]} : vector<8x96xf32> to vector<8x32xf32>
    %174 = vector.extract_strided_slice %170 {offsets = [0, 32], sizes = [8, 32], strides = [1, 1]} : vector<8x96xf32> to vector<8x32xf32>
    %175 = vector.extract_strided_slice %170 {offsets = [0, 64], sizes = [8, 32], strides = [1, 1]} : vector<8x96xf32> to vector<8x32xf32>
    %176 = arith.mulf %174, %156 : vector<8x32xf32>
    %177 = arith.mulf %173, %172 : vector<8x32xf32>
    %178 = arith.addf %176, %177 : vector<8x32xf32>
    %179 = math.tanh %178 : vector<8x32xf32>
    %180 = arith.mulf %175, %179 : vector<8x32xf32>
    %c0_46 = arith.constant 0 : index
    %c224 = arith.constant 224 : index
    %181 = vector.load %arg4[%c0_46, %c224] : memref<8x256xf32, #tpu.memory_space<vmem>>, vector<8x32xf32>
    tpu.vector_store %arg4[%c0_46, %c224], %180 {strides = array<i32>} : memref<8x256xf32, #tpu.memory_space<vmem>>, vector<8x32xf32>,
    %c0_i32_47 = arith.constant 0 : i32
    %182 = arith.cmpi eq, %arg1, %c0_i32_47 : i32
    %183 = arith.extui %182 : i1 to i32
    %c0_i32_48 = arith.constant 0 : i32
    %184 = arith.cmpi ne, %183, %c0_i32_48 : i32
    scf.if %184 {
      %c0_53 = arith.constant 0 : index
      %c0_54 = arith.constant 0 : index
      %187 = vector.load %arg5[%c0_53, %c0_54] : memref<8x32xf32, #tpu.memory_space<vmem>>, vector<8x32xf32>
      tpu.vector_store %arg5[%c0_53, %c0_54], %178 {strides = array<i32>} : memref<8x32xf32, #tpu.memory_space<vmem>>, vector<8x32xf32>,
    } else {
    }
    %c0_49 = arith.constant 0 : index
    %c0_50 = arith.constant 0 : index
    %185 = vector.load %arg6[%c0_49, %c0_50] : memref<8x32xf32, #tpu.memory_space<vmem>>, vector<8x32xf32>
    tpu.vector_store %arg6[%c0_49, %c0_50], %180 {strides = array<i32>} : memref<8x32xf32, #tpu.memory_space<vmem>>, vector<8x32xf32>,
    %c0_51 = arith.constant 0 : index
    %c0_52 = arith.constant 0 : index
    %186 = vector.load %arg7[%c0_51, %c0_52] : memref<8x32xf32, #tpu.memory_space<vmem>>, vector<8x32xf32>
    tpu.vector_store %arg7[%c0_51, %c0_52], %178 {strides = array<i32>} : memref<8x32xf32, #tpu.memory_space<vmem>>, vector<8x32xf32>,
    return
  }
  func.func @transform_0(%arg0: i32, %arg1: i32) -> (i32, i32, i32) {
    %c0_i32 = arith.constant 0 : i32
    %c0_i32_0 = arith.constant 0 : i32
    return %arg1, %arg0, %c0_i32 : i32, i32, i32
  }
  func.func @transform_1(%arg0: i32, %arg1: i32) -> (i32, i32) {
    %c0_i32 = arith.constant 0 : i32
    %c0_i32_0 = arith.constant 0 : i32
    %c0_i32_1 = arith.constant 0 : i32
    return %c0_i32, %c0_i32_0 : i32, i32
  }
  func.func @transform_2(%arg0: i32, %arg1: i32) -> (i32, i32) {
    %c0_i32 = arith.constant 0 : i32
    return %arg0, %arg1 : i32, i32
  }
  func.func @transform_3(%arg0: i32, %arg1: i32) -> (i32, i32) {
    %c0_i32 = arith.constant 0 : i32
    %c0_i32_0 = arith.constant 0 : i32
    return %arg0, %c0_i32 : i32, i32
  }
}

</mosaic_0001>

<llo_original>
// kernel: a_call__.1
$region0: #{a_call__.1}
  #allocation0 [shape = 'u32[]', space=smem, size = 0x4, offset = 0x4, fixed_abs, tag = 'smem constant byte address 0x4 - core index']
  #allocation1 [shape = 'u32[144,128]{1,0:T(1,128)}', space=vmem, size = 0x12000, scoped, tag = 'internal scratch']
  #allocation2 [shape = 'f32[8,32]{1,0:T(8,128)}', space=vmem, size = 0x1000, scoped, tag = 'scratch operand']
  #allocation3 [shape = 'f32[8,32]{1,0:T(8,128)}', space=vmem, size = 0x1000, scoped, tag = 'scratch operand']
  %s0 = inlined_call_operand.vmem [shape: f32[8,8,128], index: 0, kind: input, shape index: {}]
  %s1 = inlined_call_operand.vmem [shape: bf16[32,128], index: 1, kind: input, shape index: {}]
  %s2 = inlined_call_operand.vmem [shape: f32[8,256], index: 2, kind: output, shape index: {0}]
  %s3 = inlined_call_operand.vmem [shape: f32[8,32], index: 3, kind: output, shape index: {1}]
  %4 = xla_tuple %s2, %s3
  %s5 = sld [smem:[#allocation0]]
  $region34: #{a_call__.1} parent=0
    _
  %s7 = ssub.s32 1, %s5
  %s8 = scalar_select 0, %s7, %s5
  // Predicated region
  $region2: #{a_call__.1} parent=0 // pred_check
    _
  $region3: #{a_call__.1} parent=0 // pred_check_branch
    %10 = sbr.rel (0) target = $region5
  $region4: #{a_call__.1} parent=0 // pred_region
    _
  $region5: #{a_call__.1} parent=0 // pred_fallthru
    _
  // Predicated region
  $region6: #{a_call__.1} parent=0 // pred_check
    _
  $region7: #{a_call__.1} parent=0 // pred_check_branch
    %12 = sbr.rel (0) target = $region9
  $region8: #{a_call__.1} parent=0 // pred_region
    _
  $region9: #{a_call__.1} parent=0 // pred_fallthru
    _
  %p14 = scmp.eq.s32.totalorder 0, 0
  // Predicated region
  $region10: #{a_call__.1} parent=0 // pred_check
    %p15 = pneg %p14
  $region11: #{a_call__.1} parent=0 // pred_check_branch
    %17 = sbr.rel (%p15) target = $region13
  $region12: #{a_call__.1} parent=0 // pred_region
    %vm18 = vcmask 261120
    %19 = vst.msk [vmem:[#allocation2] sm:$0xff] %vm18, 0.0
    %20 = vst.msk [vmem:[#allocation3] sm:$0xff] %vm18, 0.0
  $region13: #{a_call__.1} parent=0 // pred_fallthru
    _
  %v21 = vld [vmem:[%s1] sm:$0xf]
  %v22 = vld [vmem:[%s1 + $0x4] sm:$0xf]
  %v23 = vld [vmem:[%s1 + $0x8] sm:$0xf]
  %v24 = vld [vmem:[%s1 + $0xc] sm:$0xf]
  %v25 = vld [vmem:[#allocation2] sm:$0xff]
  %v26 = vld [vmem:[#allocation3] sm:$0xff]
  %v27 = vld [vmem:[%s0] sm:$0xff]
  %v28 = vpack.c.bf16 %v25, %v25
  %v33 = vunpack.c.l.b16 %v21
  %v34 = vunpack.c.l.b16 %v22
  %v35 = vunpack.c.l.b16 %v23
  %v36 = vunpack.c.l.b16 %v24
  %v37 = vpack.c.b16 %v34, %v33
  %v38 = vpack.c.b16 %v36, %v35
  %vm41 = vcmask 261120
  %v43 = vsel %vm41, %v28, 0
  %45 = vmatprep.subr.bf16.mxu0 0
  %46 = vmatpush1.bf16.msra.mxu0 %v37
  %47 = vmatprep.subr.bf16.mxu0 0
  %48 = vmatpush1.bf16.msra.mxu0 %v38
  %49 = vmatprep.subr.bf16.mxu0 0
  %50 = vmatpush1.bf16.msra.mxu0 0
  %51 = vmatprep.subr.bf16.mxu0 0
  %52 = vmatpush1.bf16.msra.mxu0 0
  %53 = vmatprep.subr.bf16.mxu0 0
  %54 = vmatpush1.bf16.msra.mxu0 0
  %55 = vmatprep.subr.bf16.mxu0 0
  %56 = vmatpush1.bf16.msra.mxu0 0
  %57 = vmatprep.subr.bf16.mxu0 0
  %58 = vmatpush1.bf16.msra.mxu0 0
  %59 = vmatprep.subr.bf16.mxu0 0
  %60 = vmatpush1.bf16.msra.mxu0 0
  %61 = vmatprep.subr.bf16.mxu0 0
  %62 = vmatpush1.bf16.msra.mxu0 0
  %63 = vmatprep.subr.bf16.mxu0 0
  %64 = vmatpush1.bf16.msra.mxu0 0
  %65 = vmatprep.subr.bf16.mxu0 0
  %66 = vmatpush1.bf16.msra.mxu0 0
  %67 = vmatprep.subr.bf16.mxu0 0
  %68 = vmatpush1.bf16.msra.mxu0 0
  %69 = vmatprep.subr.bf16.mxu0 0
  %70 = vmatpush1.bf16.msra.mxu0 0
  %71 = vmatprep.subr.bf16.mxu0 0
  %72 = vmatpush1.bf16.msra.mxu0 0
  %73 = vmatprep.subr.bf16.mxu0 0
  %74 = vmatpush1.bf16.msra.mxu0 0
  %75 = vmatprep.subr.bf16.mxu0 0
  %76 = vmatpush1.bf16.msra.mxu0 0
  %77 = vmatprep.mubr.bf16.mxu0 0
  %78 = vmatmul.mubr.bf16.gmra.mrb[0].mxu0 %v43
  %v79 = vpop.f32.mrb[0].mxu0
  %v80 = vadd.f32 0.0, %v79
  %v81 = vpop.f32.mrb[0].mxu0
  %v82 = vpop.f32.mrb[0].mxu0
  %v83 = vpop.f32.mrb[0].mxu0
  %84 = vdwg.mxu0
  %v85 = vadd.f32 %v27, %v80
  %v86 = vxor.u32 %v85, 2147483648
  %v87 = vmul.f32 %v86, 1.442695
  %v88 = vpow.pop %v87
  %v89 = vadd.f32 %v88, 1.0
  %v90 = vrcp.pop %v89
  %v91 = vmul.f32 1.0, %v90
  %v92 = vtanh.pop %v85
  %94 = vrot.lane.b32.xlu0 %v26, 32
  %v95 = vpop.permute.xlu0 %94
  %v97 = vmul.f32 %v91, %v95
  %99 = vrot.lane.b32.xlu0 %v92, 32
  %v100 = vpop.permute.xlu0 %99
  %v102 = vmul.f32 %v91, %v100
  %104 = vrot.lane.b32.xlu0 %v102, 32
  %v105 = vpop.permute.xlu0 %104
  %v107 = vadd.f32 %v97, %v105
  %v108 = vtanh.pop %v107
  %110 = vrot.lane.b32.xlu0 %v108, 32
  %v111 = vpop.permute.xlu0 %110
  %v113 = vmul.f32 %v91, %v111
  %115 = vrot.lane.b32.xlu0 %v113, 64
  %v116 = vpop.permute.xlu0 %115
  %118 = vst.msk [vmem:[%s2] sm:$0xff] %vm41, %v116
  %s119 = scalar_lea.vmem %s0, 8
  %v120 = vld [vmem:[%s119] sm:$0xff]
  %v121 = vpack.c.bf16 %v113, %v113
  %123 = vrot.lane.b32.xlu0 %v121, 64
  %v124 = vpop.permute.xlu0 %123
  %v126 = vsel %vm41, %v124, 0
  %128 = vmatprep.subr.bf16.mxu0 0
  %129 = vmatpush1.bf16.msra.mxu0 %v37
  %130 = vmatprep.subr.bf16.mxu0 0
  %131 = vmatpush1.bf16.msra.mxu0 %v38
  %132 = vmatprep.subr.bf16.mxu0 0
  %133 = vmatpush1.bf16.msra.mxu0 0
  %134 = vmatprep.subr.bf16.mxu0 0
  %135 = vmatpush1.bf16.msra.mxu0 0
  %136 = vmatprep.subr.bf16.mxu0 0
  %137 = vmatpush1.bf16.msra.mxu0 0
  %138 = vmatprep.subr.bf16.mxu0 0
  %139 = vmatpush1.bf16.msra.mxu0 0
  %140 = vmatprep.subr.bf16.mxu0 0
  %141 = vmatpush1.bf16.msra.mxu0 0
  %142 = vmatprep.subr.bf16.mxu0 0
  %143 = vmatpush1.bf16.msra.mxu0 0
  %144 = vmatprep.subr.bf16.mxu0 0
  %145 = vmatpush1.bf16.msra.mxu0 0
  %146 = vmatprep.subr.bf16.mxu0 0
  %147 = vmatpush1.bf16.msra.mxu0 0
  %148 = vmatprep.subr.bf16.mxu0 0
  %149 = vmatpush1.bf16.msra.mxu0 0
  %150 = vmatprep.subr.bf16.mxu0 0
  %151 = vmatpush1.bf16.msra.mxu0 0
  %152 = vmatprep.subr.bf16.mxu0 0
  %153 = vmatpush1.bf16.msra.mxu0 0
  %154 = vmatprep.subr.bf16.mxu0 0
  %155 = vmatpush1.bf16.msra.mxu0 0
  %156 = vmatprep.subr.bf16.mxu0 0
  %157 = vmatpush1.bf16.msra.mxu0 0
  %158 = vmatprep.subr.bf16.mxu0 0
  %159 = vmatpush1.bf16.msra.mxu0 0
  %160 = vmatprep.mubr.bf16.mxu0 0
  %161 = vmatmul.mubr.bf16.gmra.mrb[0].mxu0 %v126
  %v162 = vpop.f32.mrb[0].mxu0
  %v163 = vadd.f32 0.0, %v162
  %v164 = vpop.f32.mrb[0].mxu0
  %v165 = vpop.f32.mrb[0].mxu0
  %v166 = vpop.f32.mrb[0].mxu0
  %167 = vdwg.mxu0
  %v168 = vadd.f32 %v120, %v163
  %v169 = vxor.u32 %v168, 2147483648
  %v170 = vmul.f32 %v169, 1.442695
  %v171 = vpow.pop %v170
  %v172 = vadd.f32 %v171, 1.0
  %v173 = vrcp.pop %v172
  %v174 = vmul.f32 1.0, %v173
  %v175 = vtanh.pop %v168
  %v176 = vmul.f32 %v174, %v107
  %178 = vrot.lane.b32.xlu0 %v175, 32
  %v179 = vpop.permute.xlu0 %178
  %v181 = vmul.f32 %v174, %v179
  %183 = vrot.lane.b32.xlu0 %v181, 32
  %v184 = vpop.permute.xlu0 %183
  %v186 = vadd.f32 %v176, %v184
  %v187 = vtanh.pop %v186
  %189 = vrot.lane.b32.xlu0 %v187, 32
  %v190 = vpop.permute.xlu0 %189
  %v192 = vmul.f32 %v174, %v190
  %194 = vrot.lane.b32.xlu0 %v192, 96
  %v195 = vpop.permute.xlu0 %194
  %vm197 = vcmask 523520
  %198 = vst.msk [vmem:[%s2] sm:$0xff] %vm197, %v195
  %s199 = scalar_lea.vmem %s0, 16
  %v200 = vld [vmem:[%s199] sm:$0xff]
  %v201 = vpack.c.bf16 %v192, %v192
  %203 = vrot.lane.b32.xlu0 %v201, 64
  %v204 = vpop.permute.xlu0 %203
  %v206 = vsel %vm41, %v204, 0
  %208 = vmatprep.subr.bf16.mxu0 0
  %209 = vmatpush1.bf16.msra.mxu0 %v37
  %210 = vmatprep.subr.bf16.mxu0 0
  %211 = vmatpush1.bf16.msra.mxu0 %v38
  %212 = vmatprep.subr.bf16.mxu0 0
  %213 = vmatpush1.bf16.msra.mxu0 0
  %214 = vmatprep.subr.bf16.mxu0 0
  %215 = vmatpush1.bf16.msra.mxu0 0
  %216 = vmatprep.subr.bf16.mxu0 0
  %217 = vmatpush1.bf16.msra.mxu0 0
  %218 = vmatprep.subr.bf16.mxu0 0
  %219 = vmatpush1.bf16.msra.mxu0 0
  %220 = vmatprep.subr.bf16.mxu0 0
  %221 = vmatpush1.bf16.msra.mxu0 0
  %222 = vmatprep.subr.bf16.mxu0 0
  %223 = vmatpush1.bf16.msra.mxu0 0
  %224 = vmatprep.subr.bf16.mxu0 0
  %225 = vmatpush1.bf16.msra.mxu0 0
  %226 = vmatprep.subr.bf16.mxu0 0
  %227 = vmatpush1.bf16.msra.mxu0 0
  %228 = vmatprep.subr.bf16.mxu0 0
  %229 = vmatpush1.bf16.msra.mxu0 0
  %230 = vmatprep.subr.bf16.mxu0 0
  %231 = vmatpush1.bf16.msra.mxu0 0
  %232 = vmatprep.subr.bf16.mxu0 0
  %233 = vmatpush1.bf16.msra.mxu0 0
  %234 = vmatprep.subr.bf16.mxu0 0
  %235 = vmatpush1.bf16.msra.mxu0 0
  %236 = vmatprep.subr.bf16.mxu0 0
  %237 = vmatpush1.bf16.msra.mxu0 0
  %238 = vmatprep.subr.bf16.mxu0 0
  %239 = vmatpush1.bf16.msra.mxu0 0
  %240 = vmatprep.mubr.bf16.mxu0 0
  %241 = vmatmul.mubr.bf16.gmra.mrb[0].mxu0 %v206
  %v242 = vpop.f32.mrb[0].mxu0
  %v243 = vadd.f32 0.0, %v242
  %v244 = vpop.f32.mrb[0].mxu0
  %v245 = vpop.f32.mrb[0].mxu0
  %v246 = vpop.f32.mrb[0].mxu0
  %247 = vdwg.mxu0
  %v248 = vadd.f32 %v200, %v243
  %v249 = vxor.u32 %v248, 2147483648
  %v250 = vmul.f32 %v249, 1.442695
  %v251 = vpow.pop %v250
  %v252 = vadd.f32 %v251, 1.0
  %v253 = vrcp.pop %v252
  %v254 = vmul.f32 1.0, %v253
  %v255 = vtanh.pop %v248
  %v256 = vmul.f32 %v254, %v186
  %258 = vrot.lane.b32.xlu0 %v255, 32
  %v259 = vpop.permute.xlu0 %258
  %v261 = vmul.f32 %v254, %v259
  %263 = vrot.lane.b32.xlu0 %v261, 32
  %v264 = vpop.permute.xlu0 %263
  %v266 = vadd.f32 %v256, %v264
  %v267 = vtanh.pop %v266
  %269 = vrot.lane.b32.xlu0 %v267, 32
  %v270 = vpop.permute.xlu0 %269
  %v272 = vmul.f32 %v254, %v270
  %vm273 = vcmask 785920
  %274 = vst.msk [vmem:[%s2] sm:$0xff] %vm273, %v272
  %s275 = scalar_lea.vmem %s0, 24
  %v276 = vld [vmem:[%s275] sm:$0xff]
  %v277 = vpack.c.bf16 %v272, %v272
  %279 = vrot.lane.b32.xlu0 %v277, 64
  %v280 = vpop.permute.xlu0 %279
  %v282 = vsel %vm41, %v280, 0
  %284 = vmatprep.subr.bf16.mxu0 0
  %285 = vmatpush1.bf16.msra.mxu0 %v37
  %286 = vmatprep.subr.bf16.mxu0 0
  %287 = vmatpush1.bf16.msra.mxu0 %v38
  %288 = vmatprep.subr.bf16.mxu0 0
  %289 = vmatpush1.bf16.msra.mxu0 0
  %290 = vmatprep.subr.bf16.mxu0 0
  %291 = vmatpush1.bf16.msra.mxu0 0
  %292 = vmatprep.subr.bf16.mxu0 0
  %293 = vmatpush1.bf16.msra.mxu0 0
  %294 = vmatprep.subr.bf16.mxu0 0
  %295 = vmatpush1.bf16.msra.mxu0 0
  %296 = vmatprep.subr.bf16.mxu0 0
  %297 = vmatpush1.bf16.msra.mxu0 0
  %298 = vmatprep.subr.bf16.mxu0 0
  %299 = vmatpush1.bf16.msra.mxu0 0
  %300 = vmatprep.subr.bf16.mxu0 0
  %301 = vmatpush1.bf16.msra.mxu0 0
  %302 = vmatprep.subr.bf16.mxu0 0
  %303 = vmatpush1.bf16.msra.mxu0 0
  %304 = vmatprep.subr.bf16.mxu0 0
  %305 = vmatpush1.bf16.msra.mxu0 0
  %306 = vmatprep.subr.bf16.mxu0 0
  %307 = vmatpush1.bf16.msra.mxu0 0
  %308 = vmatprep.subr.bf16.mxu0 0
  %309 = vmatpush1.bf16.msra.mxu0 0
  %310 = vmatprep.subr.bf16.mxu0 0
  %311 = vmatpush1.bf16.msra.mxu0 0
  %312 = vmatprep.subr.bf16.mxu0 0
  %313 = vmatpush1.bf16.msra.mxu0 0
  %314 = vmatprep.subr.bf16.mxu0 0
  %315 = vmatpush1.bf16.msra.mxu0 0
  %316 = vmatprep.mubr.bf16.mxu0 0
  %317 = vmatmul.mubr.bf16.gmra.mrb[0].mxu0 %v282
  %v318 = vpop.f32.mrb[0].mxu0
  %v319 = vadd.f32 0.0, %v318
  %v320 = vpop.f32.mrb[0].mxu0
  %v321 = vpop.f32.mrb[0].mxu0
  %v322 = vpop.f32.mrb[0].mxu0
  %323 = vdwg.mxu0
  %v324 = vadd.f32 %v276, %v319
  %v325 = vxor.u32 %v324, 2147483648
  %v326 = vmul.f32 %v325, 1.442695
  %v327 = vpow.pop %v326
  %v328 = vadd.f32 %v327, 1.0
  %v329 = vrcp.pop %v328
  %v330 = vmul.f32 1.0, %v329
  %v331 = vtanh.pop %v324
  %v332 = vmul.f32 %v330, %v266
  %334 = vrot.lane.b32.xlu0 %v331, 32
  %v335 = vpop.permute.xlu0 %334
  %v337 = vmul.f32 %v330, %v335
  %339 = vrot.lane.b32.xlu0 %v337, 32
  %v340 = vpop.permute.xlu0 %339
  %v342 = vadd.f32 %v332, %v340
  %v343 = vtanh.pop %v342
  %345 = vrot.lane.b32.xlu0 %v343, 32
  %v346 = vpop.permute.xlu0 %345
  %v348 = vmul.f32 %v330, %v346
  %350 = vrot.lane.b32.xlu0 %v348, 32
  %v351 = vpop.permute.xlu0 %350
  %vm353 = vcmask 1048320
  %354 = vst.msk [vmem:[%s2] sm:$0xff] %vm353, %v351
  %s355 = scalar_lea.vmem %s0, 32
  %v356 = vld [vmem:[%s355] sm:$0xff]
  %v357 = vpack.c.bf16 %v348, %v348
  %359 = vrot.lane.b32.xlu0 %v357, 64
  %v360 = vpop.permute.xlu0 %359
  %v362 = vsel %vm41, %v360, 0
  %364 = vmatprep.subr.bf16.mxu0 0
  %365 = vmatpush1.bf16.msra.mxu0 %v37
  %366 = vmatprep.subr.bf16.mxu0 0
  %367 = vmatpush1.bf16.msra.mxu0 %v38
  %368 = vmatprep.subr.bf16.mxu0 0
  %369 = vmatpush1.bf16.msra.mxu0 0
  %370 = vmatprep.subr.bf16.mxu0 0
  %371 = vmatpush1.bf16.msra.mxu0 0
  %372 = vmatprep.subr.bf16.mxu0 0
  %373 = vmatpush1.bf16.msra.mxu0 0
  %374 = vmatprep.subr.bf16.mxu0 0
  %375 = vmatpush1.bf16.msra.mxu0 0
  %376 = vmatprep.subr.bf16.mxu0 0
  %377 = vmatpush1.bf16.msra.mxu0 0
  %378 = vmatprep.subr.bf16.mxu0 0
  %379 = vmatpush1.bf16.msra.mxu0 0
  %380 = vmatprep.subr.bf16.mxu0 0
  %381 = vmatpush1.bf16.msra.mxu0 0
  %382 = vmatprep.subr.bf16.mxu0 0
  %383 = vmatpush1.bf16.msra.mxu0 0
  %384 = vmatprep.subr.bf16.mxu0 0
  %385 = vmatpush1.bf16.msra.mxu0 0
  %386 = vmatprep.subr.bf16.mxu0 0
  %387 = vmatpush1.bf16.msra.mxu0 0
  %388 = vmatprep.subr.bf16.mxu0 0
  %389 = vmatpush1.bf16.msra.mxu0 0
  %390 = vmatprep.subr.bf16.mxu0 0
  %391 = vmatpush1.bf16.msra.mxu0 0
  %392 = vmatprep.subr.bf16.mxu0 0
  %393 = vmatpush1.bf16.msra.mxu0 0
  %394 = vmatprep.subr.bf16.mxu0 0
  %395 = vmatpush1.bf16.msra.mxu0 0
  %396 = vmatprep.mubr.bf16.mxu0 0
  %397 = vmatmul.mubr.bf16.gmra.mrb[0].mxu0 %v362
  %v398 = vpop.f32.mrb[0].mxu0
  %v399 = vadd.f32 0.0, %v398
  %v400 = vpop.f32.mrb[0].mxu0
  %v401 = vpop.f32.mrb[0].mxu0
  %v402 = vpop.f32.mrb[0].mxu0
  %403 = vdwg.mxu0
  %v404 = vadd.f32 %v356, %v399
  %v405 = vxor.u32 %v404, 2147483648
  %v406 = vmul.f32 %v405, 1.442695
  %v407 = vpow.pop %v406
  %v408 = vadd.f32 %v407, 1.0
  %v409 = vrcp.pop %v408
  %v410 = vmul.f32 1.0, %v409
  %v411 = vtanh.pop %v404
  %v412 = vmul.f32 %v410, %v342
  %414 = vrot.lane.b32.xlu0 %v411, 32
  %v415 = vpop.permute.xlu0 %414
  %v417 = vmul.f32 %v410, %v415
  %419 = vrot.lane.b32.xlu0 %v417, 32
  %v420 = vpop.permute.xlu0 %419
  %v422 = vadd.f32 %v412, %v420
  %v423 = vtanh.pop %v422
  %425 = vrot.lane.b32.xlu0 %v423, 32
  %v426 = vpop.permute.xlu0 %425
  %v428 = vmul.f32 %v410, %v426
  %430 = vrot.lane.b32.xlu0 %v428, 64
  %v431 = vpop.permute.xlu0 %430
  %433 = vst.msk [vmem:[%s2 + $0x8] sm:$0xff] %vm41, %v431
  %s434 = scalar_lea.vmem %s0, 40
  %v435 = vld [vmem:[%s434] sm:$0xff]
  %v436 = vpack.c.bf16 %v428, %v428
  %438 = vrot.lane.b32.xlu0 %v436, 64
  %v439 = vpop.permute.xlu0 %438
  %v441 = vsel %vm41, %v439, 0
  %443 = vmatprep.subr.bf16.mxu0 0
  %444 = vmatpush1.bf16.msra.mxu0 %v37
  %445 = vmatprep.subr.bf16.mxu0 0
  %446 = vmatpush1.bf16.msra.mxu0 %v38
  %447 = vmatprep.subr.bf16.mxu0 0
  %448 = vmatpush1.bf16.msra.mxu0 0
  %449 = vmatprep.subr.bf16.mxu0 0
  %450 = vmatpush1.bf16.msra.mxu0 0
  %451 = vmatprep.subr.bf16.mxu0 0
  %452 = vmatpush1.bf16.msra.mxu0 0
  %453 = vmatprep.subr.bf16.mxu0 0
  %454 = vmatpush1.bf16.msra.mxu0 0
  %455 = vmatprep.subr.bf16.mxu0 0
  %456 = vmatpush1.bf16.msra.mxu0 0
  %457 = vmatprep.subr.bf16.mxu0 0
  %458 = vmatpush1.bf16.msra.mxu0 0
  %459 = vmatprep.subr.bf16.mxu0 0
  %460 = vmatpush1.bf16.msra.mxu0 0
  %461 = vmatprep.subr.bf16.mxu0 0
  %462 = vmatpush1.bf16.msra.mxu0 0
  %463 = vmatprep.subr.bf16.mxu0 0
  %464 = vmatpush1.bf16.msra.mxu0 0
  %465 = vmatprep.subr.bf16.mxu0 0
  %466 = vmatpush1.bf16.msra.mxu0 0
  %467 = vmatprep.subr.bf16.mxu0 0
  %468 = vmatpush1.bf16.msra.mxu0 0
  %469 = vmatprep.subr.bf16.mxu0 0
  %470 = vmatpush1.bf16.msra.mxu0 0
  %471 = vmatprep.subr.bf16.mxu0 0
  %472 = vmatpush1.bf16.msra.mxu0 0
  %473 = vmatprep.subr.bf16.mxu0 0
  %474 = vmatpush1.bf16.msra.mxu0 0
  %475 = vmatprep.mubr.bf16.mxu0 0
  %476 = vmatmul.mubr.bf16.gmra.mrb[0].mxu0 %v441
  %v477 = vpop.f32.mrb[0].mxu0
  %v478 = vadd.f32 0.0, %v477
  %v479 = vpop.f32.mrb[0].mxu0
  %v480 = vpop.f32.mrb[0].mxu0
  %v481 = vpop.f32.mrb[0].mxu0
  %482 = vdwg.mxu0
  %v483 = vadd.f32 %v435, %v478
  %v484 = vxor.u32 %v483, 2147483648
  %v485 = vmul.f32 %v484, 1.442695
  %v486 = vpow.pop %v485
  %v487 = vadd.f32 %v486, 1.0
  %v488 = vrcp.pop %v487
  %v489 = vmul.f32 1.0, %v488
  %v490 = vtanh.pop %v483
  %v491 = vmul.f32 %v489, %v422
  %493 = vrot.lane.b32.xlu0 %v490, 32
  %v494 = vpop.permute.xlu0 %493
  %v496 = vmul.f32 %v489, %v494
  %498 = vrot.lane.b32.xlu0 %v496, 32
  %v499 = vpop.permute.xlu0 %498
  %v501 = vadd.f32 %v491, %v499
  %v502 = vtanh.pop %v501
  %504 = vrot.lane.b32.xlu0 %v502, 32
  %v505 = vpop.permute.xlu0 %504
  %v507 = vmul.f32 %v489, %v505
  %509 = vrot.lane.b32.xlu0 %v507, 96
  %v510 = vpop.permute.xlu0 %509
  %512 = vst.msk [vmem:[%s2 + $0x8] sm:$0xff] %vm197, %v510
  %s513 = scalar_lea.vmem %s0, 48
  %v514 = vld [vmem:[%s513] sm:$0xff]
  %v515 = vpack.c.bf16 %v507, %v507
  %517 = vrot.lane.b32.xlu0 %v515, 64
  %v518 = vpop.permute.xlu0 %517
  %v520 = vsel %vm41, %v518, 0
  %522 = vmatprep.subr.bf16.mxu0 0
  %523 = vmatpush1.bf16.msra.mxu0 %v37
  %524 = vmatprep.subr.bf16.mxu0 0
  %525 = vmatpush1.bf16.msra.mxu0 %v38
  %526 = vmatprep.subr.bf16.mxu0 0
  %527 = vmatpush1.bf16.msra.mxu0 0
  %528 = vmatprep.subr.bf16.mxu0 0
  %529 = vmatpush1.bf16.msra.mxu0 0
  %530 = vmatprep.subr.bf16.mxu0 0
  %531 = vmatpush1.bf16.msra.mxu0 0
  %532 = vmatprep.subr.bf16.mxu0 0
  %533 = vmatpush1.bf16.msra.mxu0 0
  %534 = vmatprep.subr.bf16.mxu0 0
  %535 = vmatpush1.bf16.msra.mxu0 0
  %536 = vmatprep.subr.bf16.mxu0 0
  %537 = vmatpush1.bf16.msra.mxu0 0
  %538 = vmatprep.subr.bf16.mxu0 0
  %539 = vmatpush1.bf16.msra.mxu0 0
  %540 = vmatprep.subr.bf16.mxu0 0
  %541 = vmatpush1.bf16.msra.mxu0 0
  %542 = vmatprep.subr.bf16.mxu0 0
  %543 = vmatpush1.bf16.msra.mxu0 0
  %544 = vmatprep.subr.bf16.mxu0 0
  %545 = vmatpush1.bf16.msra.mxu0 0
  %546 = vmatprep.subr.bf16.mxu0 0
  %547 = vmatpush1.bf16.msra.mxu0 0
  %548 = vmatprep.subr.bf16.mxu0 0
  %549 = vmatpush1.bf16.msra.mxu0 0
  %550 = vmatprep.subr.bf16.mxu0 0
  %551 = vmatpush1.bf16.msra.mxu0 0
  %552 = vmatprep.subr.bf16.mxu0 0
  %553 = vmatpush1.bf16.msra.mxu0 0
  %554 = vmatprep.mubr.bf16.mxu0 0
  %555 = vmatmul.mubr.bf16.gmra.mrb[0].mxu0 %v520
  %v556 = vpop.f32.mrb[0].mxu0
  %v557 = vadd.f32 0.0, %v556
  %v558 = vpop.f32.mrb[0].mxu0
  %v559 = vpop.f32.mrb[0].mxu0
  %v560 = vpop.f32.mrb[0].mxu0
  %561 = vdwg.mxu0
  %v562 = vadd.f32 %v514, %v557
  %v563 = vxor.u32 %v562, 2147483648
  %v564 = vmul.f32 %v563, 1.442695
  %v565 = vpow.pop %v564
  %v566 = vadd.f32 %v565, 1.0
  %v567 = vrcp.pop %v566
  %v568 = vmul.f32 1.0, %v567
  %v569 = vtanh.pop %v562
  %v570 = vmul.f32 %v568, %v501
  %572 = vrot.lane.b32.xlu0 %v569, 32
  %v573 = vpop.permute.xlu0 %572
  %v575 = vmul.f32 %v568, %v573
  %577 = vrot.lane.b32.xlu0 %v575, 32
  %v578 = vpop.permute.xlu0 %577
  %v580 = vadd.f32 %v570, %v578
  %v581 = vtanh.pop %v580
  %583 = vrot.lane.b32.xlu0 %v581, 32
  %v584 = vpop.permute.xlu0 %583
  %v586 = vmul.f32 %v568, %v584
  %587 = vst.msk [vmem:[%s2 + $0x8] sm:$0xff] %vm273, %v586
  %s588 = scalar_lea.vmem %s0, 56
  %v589 = vld [vmem:[%s588] sm:$0xff]
  %v590 = vpack.c.bf16 %v586, %v586
  %592 = vrot.lane.b32.xlu0 %v590, 64
  %v593 = vpop.permute.xlu0 %592
  %v595 = vsel %vm41, %v593, 0
  %597 = vmatprep.subr.bf16.mxu0 0
  %598 = vmatpush1.bf16.msra.mxu0 %v37
  %599 = vmatprep.subr.bf16.mxu0 0
  %600 = vmatpush1.bf16.msra.mxu0 %v38
  %601 = vmatprep.subr.bf16.mxu0 0
  %602 = vmatpush1.bf16.msra.mxu0 0
  %603 = vmatprep.subr.bf16.mxu0 0
  %604 = vmatpush1.bf16.msra.mxu0 0
  %605 = vmatprep.subr.bf16.mxu0 0
  %606 = vmatpush1.bf16.msra.mxu0 0
  %607 = vmatprep.subr.bf16.mxu0 0
  %608 = vmatpush1.bf16.msra.mxu0 0
  %609 = vmatprep.subr.bf16.mxu0 0
  %610 = vmatpush1.bf16.msra.mxu0 0
  %611 = vmatprep.subr.bf16.mxu0 0
  %612 = vmatpush1.bf16.msra.mxu0 0
  %613 = vmatprep.subr.bf16.mxu0 0
  %614 = vmatpush1.bf16.msra.mxu0 0
  %615 = vmatprep.subr.bf16.mxu0 0
  %616 = vmatpush1.bf16.msra.mxu0 0
  %617 = vmatprep.subr.bf16.mxu0 0
  %618 = vmatpush1.bf16.msra.mxu0 0
  %619 = vmatprep.subr.bf16.mxu0 0
  %620 = vmatpush1.bf16.msra.mxu0 0
  %621 = vmatprep.subr.bf16.mxu0 0
  %622 = vmatpush1.bf16.msra.mxu0 0
  %623 = vmatprep.subr.bf16.mxu0 0
  %624 = vmatpush1.bf16.msra.mxu0 0
  %625 = vmatprep.subr.bf16.mxu0 0
  %626 = vmatpush1.bf16.msra.mxu0 0
  %627 = vmatprep.subr.bf16.mxu0 0
  %628 = vmatpush1.bf16.msra.mxu0 0
  %629 = vmatprep.mubr.bf16.mxu0 0
  %630 = vmatmul.mubr.bf16.gmra.mrb[0].mxu0 %v595
  %v631 = vpop.f32.mrb[0].mxu0
  %v632 = vadd.f32 0.0, %v631
  %v633 = vpop.f32.mrb[0].mxu0
  %v634 = vpop.f32.mrb[0].mxu0
  %v635 = vpop.f32.mrb[0].mxu0
  %636 = vdwg.mxu0
  %v637 = vadd.f32 %v589, %v632
  %v638 = vxor.u32 %v637, 2147483648
  %v639 = vmul.f32 %v638, 1.442695
  %v640 = vpow.pop %v639
  %v641 = vadd.f32 %v640, 1.0
  %v642 = vrcp.pop %v641
  %v643 = vmul.f32 1.0, %v642
  %v644 = vtanh.pop %v637
  %v645 = vmul.f32 %v643, %v580
  %647 = vrot.lane.b32.xlu0 %v644, 32
  %v648 = vpop.permute.xlu0 %647
  %v650 = vmul.f32 %v643, %v648
  %652 = vrot.lane.b32.xlu0 %v650, 32
  %v653 = vpop.permute.xlu0 %652
  %v655 = vadd.f32 %v645, %v653
  %v656 = vtanh.pop %v655
  %658 = vrot.lane.b32.xlu0 %v656, 32
  %v659 = vpop.permute.xlu0 %658
  %v661 = vmul.f32 %v643, %v659
  %663 = vrot.lane.b32.xlu0 %v661, 32
  %v664 = vpop.permute.xlu0 %663
  %666 = vst.msk [vmem:[%s2 + $0x8] sm:$0xff] %vm353, %v664
  // Predicated region
  $region14: #{a_call__.1} parent=0 // pred_check
    %p667 = pneg %p14
  $region15: #{a_call__.1} parent=0 // pred_check_branch
    %669 = sbr.rel (%p667) target = $region17
  $region16: #{a_call__.1} parent=0 // pred_region
    %671 = vrot.lane.b32.xlu0 %v655, 96
    %v672 = vpop.permute.xlu0 %671
    %674 = vst.msk [vmem:[%s3] sm:$0xff] %vm41, %v672
  $region17: #{a_call__.1} parent=0 // pred_fallthru
    _
  %675 = vrot.lane.b32.xlu0 %v661, 64
  %v676 = vpop.permute.xlu0 %675
  %678 = vst.msk [vmem:[#allocation2] sm:$0xff] %vm41, %v676
  %680 = vrot.lane.b32.xlu0 %v655, 96
  %v681 = vpop.permute.xlu0 %680
  %683 = vst.msk [vmem:[#allocation3] sm:$0xff] %vm41, %v681
  // Predicated region
  $region18: #{a_call__.1} parent=0 // pred_check
    _
  $region19: #{a_call__.1} parent=0 // pred_check_branch
    %685 = sbr.rel (0) target = $region21
  $region20: #{a_call__.1} parent=0 // pred_region
    _
  $region21: #{a_call__.1} parent=0 // pred_fallthru
    _
  // Predicated region
  $region22: #{a_call__.1} parent=0 // pred_check
    _
  $region23: #{a_call__.1} parent=0 // pred_check_branch
    %687 = sbr.rel (0) target = $region25
  $region24: #{a_call__.1} parent=0 // pred_region
    _
  $region25: #{a_call__.1} parent=0 // pred_fallthru
    _
  // Predicated region
  $region26: #{a_call__.1} parent=0 // pred_check
    _
  $region27: #{a_call__.1} parent=0 // pred_check_branch
    %689 = sbr.rel (0) target = $region29
  $region28: #{a_call__.1} parent=0 // pred_region
    _
  $region29: #{a_call__.1} parent=0 // pred_fallthru
    _
  // Predicated region
  $region30: #{a_call__.1} parent=0 // pred_check
    _
  $region31: #{a_call__.1} parent=0 // pred_check_branch
    %691 = sbr.rel (0) target = $region33
  $region32: #{a_call__.1} parent=0 // pred_region
    _
  $region33: #{a_call__.1} parent=0 // pred_fallthru
    _

</llo_original>
